<compile_context>
chip_gen: v6e
topology: v6e:2x2x1
jax: 0.10.0
libtpu: 0.0.40
codegen_flags: <defaults>
</compile_context>

<pallas_src>
import functools

import numpy as np
import jax
import jax.numpy as jnp
from jax import lax
from jax.experimental import pallas as pl
from jax.experimental.pallas import tpu as pltpu

LRELU_SLOPE = 0.2
LRELU_GAIN = float(np.sqrt(2.0))   # bias_act def_gain for 'lrelu'

_LANE = 128
_SINGLE_K_MAX = 2048   # padded K up to this uses the scratch-free single-step kernel


def _round_up(x, m):
    return ((x + m - 1) // m) * m


@functools.lru_cache(maxsize=None)
def _vmem_limit_bytes():
    # Generation-aware scoped-VMEM budget: v5e/v6e have 128 MiB/TC, v7x only 64 MiB.
    try:
        cap = int(pltpu.get_tpu_info().vmem_capacity_bytes)
    except Exception:
        cap = 64 * 1024 * 1024
    return int(min(cap * 3 // 4, 64 * 1024 * 1024))


def _activate(y, activation):
    if activation == 'linear':
        return y
    if activation == 'lrelu':
        return jnp.where(y >= 0, y, LRELU_SLOPE * y) * LRELU_GAIN
    # TODO(synk): other bias_act modes (tanh/sigmoid/clamp) are unused by this module.
    raise NotImplementedError(activation)


# ----------------------------------------------------------------------------
# Kernels
# ----------------------------------------------------------------------------
def _fc_kernel_single_k(x_ref, w_ref, b_ref, o_ref, *,
                        weight_gain, bias_gain, activation):
    # Whole K in one MXU pass: no scratch, no init, no copy-out.
    acc = lax.dot_general(
        x_ref[...], w_ref[...],
        dimension_numbers=(((1,), (0,)), ((), ())),   # (tm,K) @ (K,tn)
        preferred_element_type=jnp.float32)
    y = acc * weight_gain + b_ref[...].astype(jnp.float32) * bias_gain
    o_ref[...] = _activate(y, activation).astype(o_ref.dtype)


def _fc_kernel_multi_k(x_ref, w_ref, b_ref, o_ref, acc_ref, *,
                       weight_gain, bias_gain, activation, nk):
    k = pl.program_id(2)
    part = lax.dot_general(
        x_ref[...], w_ref[...],
        dimension_numbers=(((1,), (0,)), ((), ())),   # (tm,tk) @ (tk,tn)
        preferred_element_type=jnp.float32)

    @pl.when(k == 0)
    def _():
        acc_ref[...] = part            # overwrite-init: no zero-fill pass

    @pl.when(k > 0)
    def _():
        acc_ref[...] += part

    @pl.when(k == nk - 1)
    def _():
        y = acc_ref[...] * weight_gain + b_ref[...].astype(jnp.float32) * bias_gain
        o_ref[...] = _activate(y, activation).astype(o_ref.dtype)


# ----------------------------------------------------------------------------
# Parameter prep (once per module) + per-call apply
# ----------------------------------------------------------------------------
def prepare_fc_params(weight, bias=None, *, activation='linear', lr_multiplier=1.0,
                      mxu_dtype=jnp.bfloat16, tn=512, tk=512):
    """One-time prep: transpose W to (K, N), pad to tile multiples, cast to MXU dtype."""
    N, K = weight.shape
    sub = 16 if (mxu_dtype is not None and jnp.dtype(mxu_dtype).itemsize < 4) else 8

    tn = min(int(tn), _round_up(N, _LANE))
    # v7x has 2 TensorCores: if N fits in a single tile, split it so the
    # ("parallel","parallel") grid exposes >= 2 blocks (keeps tn a 128-multiple).
    if _round_up(N, tn) == tn and tn % 256 == 0:
        tn //= 2
    Np = _round_up(N, tn)

    tk = min(int(tk), _round_up(K, _LANE))
    Kp = _round_up(K, tk)
    if Kp <= _SINGLE_K_MAX:
        tk = Kp                       # single K step -> scratch-free kernel

    w_t = jnp.transpose(jnp.asarray(weight))          # (K, N), canonical MXU orientation
    if (Kp, Np) != (K, N):
        w_t = jnp.pad(w_t, ((0, Kp - K), (0, Np - N)))   # zero K-pad contributes 0
    if mxu_dtype is not None:
        w_t = w_t.astype(mxu_dtype)

    if bias is None:
        b_p = jnp.zeros((1, Np), jnp.float32)
    else:
        b_p = jnp.asarray(bias, jnp.float32).reshape(1, N)
        if Np != N:
            b_p = jnp.pad(b_p, ((0, 0), (0, Np - N)))

    return dict(w_t=w_t, b=b_p, N=N, K=K, Np=Np, Kp=Kp, tn=tn, tk=tk, sub=sub,
                weight_gain=float(lr_multiplier) / float(np.sqrt(K)),
                bias_gain=float(lr_multiplier),
                activation=activation, mxu_dtype=mxu_dtype)


def fc_apply(params, x, *, tm=512):
    N, K = params['N'], params['K']
    Np, Kp = params['Np'], params['Kp']
    tn, tk, sub = params['tn'], params['tk'], params['sub']
    assert x.shape[-1] == K, (x.shape, K)

    lead = x.shape[:-1]
    x2 = x.reshape(-1, K)
    M = x2.shape[0]

    tm = min(int(tm), _round_up(M, sub))   # sub=16 for bf16 operands, 8 for f32
    Mp = _round_up(M, tm)

    x_p = x2 if (Mp, Kp) == (M, K) else jnp.pad(x2, ((0, Mp - M), (0, Kp - K)))
    if params['mxu_dtype'] is not None:
        x_p = x_p.astype(params['mxu_dtype'])

    nk = Kp // tk
    out_dtype = x.dtype
    kern_kwargs = dict(weight_gain=params['weight_gain'],
                       bias_gain=params['bias_gain'],
                       activation=params['activation'])
    vmem_limit = _vmem_limit_bytes()

    if nk == 1:
        grid = (Mp // tm, Np // tn)
        out = pl.pallas_call(
            functools.partial(_fc_kernel_single_k, **kern_kwargs),
            out_shape=jax.ShapeDtypeStruct((Mp, Np), out_dtype),
            grid_spec=pltpu.PrefetchScalarGridSpec(
                num_scalar_prefetch=0,
                grid=grid,
                in_specs=[
                    pl.BlockSpec((tm, Kp), lambda m, n: (m, 0)),   # x   (full K)
                    pl.BlockSpec((Kp, tn), lambda m, n: (0, n)),   # W^T (K, N)
                    pl.BlockSpec((1, tn), lambda m, n: (0, n)),    # bias
                ],
                out_specs=pl.BlockSpec((tm, tn), lambda m, n: (m, n)),
            ),
            compiler_params=pltpu.CompilerParams(
                dimension_semantics=("parallel", "parallel"),
                vmem_limit_bytes=vmem_limit),
        )(x_p, params['w_t'], params['b'])
    else:
        grid = (Mp // tm, Np // tn, nk)
        out = pl.pallas_call(
            functools.partial(_fc_kernel_multi_k, nk=nk, **kern_kwargs),
            out_shape=jax.ShapeDtypeStruct((Mp, Np), out_dtype),
            grid_spec=pltpu.PrefetchScalarGridSpec(
                num_scalar_prefetch=0,
                grid=grid,
                in_specs=[
                    pl.BlockSpec((tm, tk), lambda m, n, k: (m, k)),   # x
                    pl.BlockSpec((tk, tn), lambda m, n, k: (k, n)),   # W^T
                    pl.BlockSpec((1, tn), lambda m, n, k: (0, n)),    # bias
                ],
                out_specs=pl.BlockSpec((tm, tn), lambda m, n, k: (m, n)),
                scratch_shapes=[pltpu.VMEM((tm, tn), jnp.float32)],
            ),
            compiler_params=pltpu.CompilerParams(
                dimension_semantics=("parallel", "parallel", "arbitrary"),
                vmem_limit_bytes=vmem_limit),
        )(x_p, params['w_t'], params['b'])

    return out[:M, :N].reshape(lead + (N,))


def make_fully_connected(weight, bias=None, *, activation='linear', lr_multiplier=1.0,
                         mxu_dtype=jnp.bfloat16, tm=512, tn=512, tk=512):
    """Prep params once (transpose/pad/cast amortized) and return apply(x)."""
    params = prepare_fc_params(weight, bias, activation=activation,
                               lr_multiplier=lr_multiplier, mxu_dtype=mxu_dtype,
                               tn=tn, tk=tk)
    return functools.partial(fc_apply, params, tm=tm)


def fully_connected(x, weight, bias=None, *, activation='linear', lr_multiplier=1.0,
                    mxu_dtype=jnp.bfloat16, tm=512, tn=512, tk=512):
    """One-shot convenience wrapper (prep is NOT amortized across calls)."""
    return make_fully_connected(weight, bias, activation=activation,
                                lr_multiplier=lr_multiplier, mxu_dtype=mxu_dtype,
                                tm=tm, tn=tn, tk=tk)(x)


# ----------------------------------------------------------------------------
# Host-side float64 reference (mirrors the PyTorch module; precision-policy free)
# ----------------------------------------------------------------------------
def reference_fc(x, weight, bias, activation, lr_multiplier):
    xd = np.asarray(x, np.float64)
    wd = np.asarray(weight, np.float64) * (lr_multiplier / np.sqrt(weight.shape[1]))
    y = xd @ wd.T
    if bias is not None:
        y = y + np.asarray(bias, np.float64) * lr_multiplier
    if activation == 'lrelu':
        y = np.where(y >= 0, y, LRELU_SLOPE * y) * LRELU_GAIN
    return y.astype(np.float32)


def _check(got, want, rtol, atol, name):
    got = np.asarray(got)
    want = np.asarray(want)
    err = float(np.max(np.abs(got - want))) if got.size else 0.0
    assert got.shape == want.shape, (name, got.shape, want.shape)
    assert np.allclose(got, want, rtol=rtol, atol=atol), f"{name}: max abs err {err}"


if __name__ == "__main__":
    key = jax.random.PRNGKey(0)
    ks = jax.random.split(key, 10)

    # ---- Test 1: two small stacked FC layers (default bf16 MXU operands) ----
    B, IN, HID, OUT = 8, 256, 512, 64
    x = jax.random.normal(ks[0], (B, IN), jnp.float32)
    w1 = jax.random.normal(ks[1], (HID, IN), jnp.float32)
    b1 = 0.1 * jax.random.normal(ks[2], (HID,), jnp.float32)
    w2 = jax.random.normal(ks[3], (OUT, HID), jnp.float32)
    b2 = 0.1 * jax.random.normal(ks[4], (OUT,), jnp.float32)

    fc1 = make_fully_connected(w1, b1, activation='lrelu', lr_multiplier=1.0)
    fc2 = make_fully_connected(w2, b2, activation='linear', lr_multiplier=2.0)

    h = jax.block_until_ready(fc1(x))
    y = jax.block_until_ready(fc2(h))
    assert h.shape == (B, HID) and y.shape == (B, OUT)
    h_ref = reference_fc(x, w1, b1, 'lrelu', 1.0)
    y_ref = reference_fc(h, w2, b2, 'linear', 2.0)     # per-layer check on same input
    _check(h, h_ref, 3e-2, 3e-2, "fc1 (bf16)")          # bf16 operands -> looser tol
    _check(y, y_ref, 3e-2, 3e-2, "fc2 (bf16)")

    # ---- Test 2: f32-operand mode, tighter tolerance (exact semantics path) ----
    fc1_f32 = make_fully_connected(w1, b1, activation='lrelu', lr_multiplier=1.0,
                                   mxu_dtype=None)
    h32 = jax.block_until_ready(fc1_f32(x))
    _check(h32, h_ref, 1e-2, 1e-2, "fc1 (f32)")

    # ---- Test 3: ragged shapes, no bias (bf16 default) ----
    B2, IN2, OUT2 = 5, 300, 7
    xr = jax.random.normal(ks[5], (B2, IN2), jnp.float32)
    wr = jax.random.normal(ks[6], (OUT2, IN2), jnp.float32)
    yr = jax.block_until_ready(
        fully_connected(xr, wr, None, activation='linear', lr_multiplier=1.0))
    _check(yr, reference_fc(xr, wr, None, 'linear', 1.0), 3e-2, 3e-2, "ragged (bf16)")

    # ---- Test 4: multi-K-step accumulator path (K > single-step threshold) ----
    B3, IN3, OUT3 = 4, 2560, 64
    x3 = jax.random.normal(ks[7], (B3, IN3), jnp.float32)
    w3 = jax.random.normal(ks[8], (OUT3, IN3), jnp.float32)
    b3 = 0.1 * jax.random.normal(ks[9], (OUT3,), jnp.float32)
    y3 = jax.block_until_ready(
        fully_connected(x3, w3, b3, activation='lrelu', lr_multiplier=1.0,
                        mxu_dtype=None))
    _check(y3, reference_fc(x3, w3, b3, 'lrelu', 1.0), 1e-2, 1e-2, "multi-K (f32)")

    print("KERNEL_OK")
</pallas_src>

<mosaic_0001>
module attributes {stable_mosaic.version = 11 : i64} {
  func.func @_fc_kernel_single_k(%arg0: i32, %arg1: i32, %arg2: memref<16x256xbf16, #tpu.memory_space<vmem>>, %arg3: memref<256x256xbf16, #tpu.memory_space<vmem>>, %arg4: memref<1x256xf32, #tpu.memory_space<vmem>>, %arg5: memref<16x256xf32, #tpu.memory_space<vmem>>) attributes {dimension_semantics = [#tpu.dimension_semantics<parallel>, #tpu.dimension_semantics<parallel>], iteration_bounds = array<i64: 1, 2>, scalar_prefetch = 0 : i64, scratch_operands = 0 : i64, tpu.core_type = #tpu.core_type<tc>, window_params = [{transform_indices = @transform_0, window_bounds = array<i64: 16, 256>}, {transform_indices = @transform_1, window_bounds = array<i64: 256, 256>}, {transform_indices = @transform_2, window_bounds = array<i64: 1, 256>}, {transform_indices = @transform_3, window_bounds = array<i64: 16, 256>}]} {
    %c0 = arith.constant 0 : index
    %c0_0 = arith.constant 0 : index
    %0 = vector.load %arg2[%c0, %c0_0] : memref<16x256xbf16, #tpu.memory_space<vmem>>, vector<16x256xbf16>
    %c0_1 = arith.constant 0 : index
    %c0_2 = arith.constant 0 : index
    %1 = vector.load %arg3[%c0_1, %c0_2] : memref<256x256xbf16, #tpu.memory_space<vmem>>, vector<256x256xbf16>
    %cst = arith.constant dense<0.000000e+00> : vector<16x256xf32>
    %2 = tpu.matmul %0, %1, %cst {dimension_numbers = #tpu.dot_dimension_numbers<[1], [0], [0], [1], [0, 0, 1, 1], [], []>} : vector<16x256xbf16>, vector<256x256xbf16>, vector<16x256xf32> -> vector<16x256xf32>
    %cst_3 = arith.constant 6.250000e-02 : f32
    %3 = vector.broadcast %cst_3 : f32 to vector<16x256xf32>
    %4 = arith.mulf %2, %3 : vector<16x256xf32>
    %c0_4 = arith.constant 0 : index
    %c0_5 = arith.constant 0 : index
    %5 = vector.load %arg4[%c0_4, %c0_5] : memref<1x256xf32, #tpu.memory_space<vmem>>, vector<1x256xf32>
    %cst_6 = arith.constant 1.000000e+00 : f32
    %6 = vector.broadcast %cst_6 : f32 to vector<1x256xf32>
    %7 = arith.mulf %5, %6 : vector<1x256xf32>
    %8 = vector.broadcast %7 : vector<1x256xf32> to vector<16x256xf32>
    %9 = arith.addf %4, %8 : vector<16x256xf32>
    %cst_7 = arith.constant 0.000000e+00 : f32
    %10 = vector.broadcast %cst_7 : f32 to vector<16x256xf32>
    %11 = arith.cmpf oge, %9, %10 : vector<16x256xf32>
    %cst_8 = arith.constant 2.000000e-01 : f32
    %12 = vector.broadcast %cst_8 : f32 to vector<16x256xf32>
    %13 = arith.mulf %12, %9 : vector<16x256xf32>
    %14 = arith.select %11, %9, %13 : vector<16x256xi1>, vector<16x256xf32>
    %cst_9 = arith.constant 1.41421354 : f32
    %15 = vector.broadcast %cst_9 : f32 to vector<16x256xf32>
    %16 = arith.mulf %14, %15 : vector<16x256xf32>
    %c0_10 = arith.constant 0 : index
    %c0_11 = arith.constant 0 : index
    %17 = vector.load %arg5[%c0_10, %c0_11] : memref<16x256xf32, #tpu.memory_space<vmem>>, vector<16x256xf32>
    tpu.vector_store %arg5[%c0_10, %c0_11], %16 {strides = array<i32>} : memref<16x256xf32, #tpu.memory_space<vmem>>, vector<16x256xf32>,
    return
  }
  func.func @transform_0(%arg0: i32, %arg1: i32) -> (i32, i32) {
    %c0_i32 = arith.constant 0 : i32
    %c0_i32_0 = arith.constant 0 : i32
    return %arg0, %c0_i32 : i32, i32
  }
  func.func @transform_1(%arg0: i32, %arg1: i32) -> (i32, i32) {
    %c0_i32 = arith.constant 0 : i32
    %c0_i32_0 = arith.constant 0 : i32
    return %c0_i32, %arg1 : i32, i32
  }
  func.func @transform_2(%arg0: i32, %arg1: i32) -> (i32, i32) {
    %c0_i32 = arith.constant 0 : i32
    %c0_i32_0 = arith.constant 0 : i32
    return %c0_i32, %arg1 : i32, i32
  }
  func.func @transform_3(%arg0: i32, %arg1: i32) -> (i32, i32) {
    %c0_i32 = arith.constant 0 : i32
    return %arg0, %arg1 : i32, i32
  }
}

</mosaic_0001>

<llo_original>
// kernel: tpu_custom_call.1
$region0: #{tpu_custom_call.1}
  #allocation0 [shape = 'u32[]', space=smem, size = 0x4, offset = 0x4, fixed_abs, tag = 'smem constant byte address 0x4 - core index']
  #allocation1 [shape = 'u32[144,128]{1,0:T(1,128)}', space=vmem, size = 0x12000, scoped, tag = 'internal scratch']
  %s0 = inlined_call_operand.hbm [shape: bf16[16,256], index: 0, kind: input, shape index: {}]
  %s1 = inlined_call_operand.hbm [shape: bf16[256,512], index: 1, kind: input, shape index: {}]
  %s2 = inlined_call_operand.hbm [shape: f32[1,512], index: 2, kind: input, shape index: {}]
  %s3 = inlined_call_operand.hbm [shape: f32[16,512], index: 3, kind: output, shape index: {}]
  %s4 = sld [smem:[#allocation0]]
  $region57: #{tpu_custom_call.1} parent=0
    _
  %s6 = ssub.s32 1, %s4
  %s7 = scalar_select 0, %s6, %s4
  $region1: #{tpu_custom_call.1} parent=0
    #allocation2 [shape = 'u8[8192]{0}', space=vmem, size = 0x2000, scoped, tag = 'input window, operand 0, single buffered']
    #allocation3 [shape = 's32[2]{0}', space=sflag, size = 0x8, scoped, tag = 'scoped memory for tpu_custom_call.1']
    #allocation4 [shape = 's32[2]{0}', space=sflag, size = 0x8, scoped, tag = 'scoped memory for tpu_custom_call.1']
    #allocation5 [shape = 'u8[262144]{0}', space=vmem, size = 0x40000, scoped, tag = 'input window, operand 1']
    #allocation6 [shape = 's32[2]{0}', space=sflag, size = 0x8, scoped, tag = 'scoped memory for tpu_custom_call.1']
    #allocation7 [shape = 'u8[2048]{0}', space=vmem, size = 0x800, scoped, tag = 'input window, operand 2']
    #allocation8 [shape = 'u8[32768]{0}', space=vmem, size = 0x8000, scoped, tag = 'output window, operand 0']
    %8 = vsyncpa [#allocation3], 0
    %9 = vsyncpa [#allocation6], 0
    %s10 = scalar_lea.sflag [#allocation6], 1
    %11 = vsyncpa %s10, 0
    %12 = vsyncpa [#allocation4], 0
    %s13 = scalar_lea.sflag [#allocation4], 1
    %14 = vsyncpa %s13, 0
    loop: start=0, step=1, limit=4
    $region2: #{tpu_custom_call.1} parent=1 // loop_pre_header
      _
    $region3: #{tpu_custom_call.1} parent=1 // loop_header
      %s16 = sphi 0, %s20
      %p17 = scmp.ge.s32.totalorder %s16, 4
      %s23 = sphi 0, %s35
      %s24 = sphi 0, %s31
      %s25 = sphi 0, %s23
      %s26 = sphi 0, %s24
      %s27 = sphi 0, %s25
      %s28 = sphi 0, %s26
      %s38 = sphi 0, %s40
      %s41 = sphi 0, %s38
      %s42 = sphi 0, %s41
      %s58 = sphi 0, %s42
      %s64 = sphi 0, %s66
      %s67 = sphi 0, %s64
      %s68 = sphi 0, %s67
      %s84 = sphi 0, %s68
      %s90 = sphi 0, %s92
      %s93 = sphi 0, %s90
      %s94 = sphi 0, %s93
      %s110 = sphi 0, %s94
      %s118 = sphi 0, %s120
      %s121 = sphi 0, %s118
      %s122 = sphi 0, %s121
      %s138 = sphi 0, %s122
    $region4: #{tpu_custom_call.1} parent=1 // loop_header_branch
      %19 = sbr.rel (%p17) target = $region8
    $region5: #{tpu_custom_call.1} parent=1 // loop_body
      %s21 = ssub.s32 %s16, 1
      %s22 = ssub.s32 %s16, 2
      %s29 = sadd.s32 1, %s24
      %p30 = scmp.ge.s32.totalorder %s29, 2
      %s31 = scalar_select %p30, 0, %s29
      %s32 = sadd.s32 1, %s23
      %s33 = scalar_select %p30, %s32, %s23
      %p34 = scmp.ge.s32.totalorder %s33, 1
      %s35 = scalar_select %p34, 0, %s33
      %s36 = ssub.s32 %s23, %s35
      %p37 = scmp.eq.s32.totalorder %s36, 0
      %s39 = sadd.s32 %s38, 1
      %s40 = scalar_select %p37, %s38, %s39
      %p43 = pneg %p37
      %p44 = scmp.eq.s32.totalorder %s16, 1
      %p45 = por %p43, %p44
      %p46 = scmp.ne.s32.totalorder %s38, %s41
      %p47 = scmp.eq.s32.totalorder %s16, 0
      %p48 = por %p46, %p47
      %p49 = scmp.ne.s32.totalorder %s38, %s41
      %p50 = scmp.eq.s32.totalorder %s21, 1
      %p51 = por %p49, %p50
      %p52 = scmp.ne.s32.totalorder %s41, %s42
      %p53 = scmp.eq.s32.totalorder %s21, 0
      %p54 = por %p52, %p53
      %p55 = scmp.ne.s32.totalorder %s41, %s42
      %p56 = scmp.eq.s32.totalorder %s22, 1
      %p57 = por %p55, %p56
      %p59 = scmp.ne.s32.totalorder %s42, %s58
      %p60 = scmp.eq.s32.totalorder %s22, 0
      %p61 = por %p59, %p60
      %s62 = ssub.s32 %s24, %s31
      %p63 = scmp.eq.s32.totalorder %s62, 0
      %s65 = sadd.s32 %s64, 1
      %s66 = scalar_select %p63, %s64, %s65
      %p69 = pneg %p63
      %p70 = scmp.eq.s32.totalorder %s16, 1
      %p71 = por %p69, %p70
      %p72 = scmp.ne.s32.totalorder %s64, %s67
      %p73 = scmp.eq.s32.totalorder %s16, 0
      %p74 = por %p72, %p73
      %p75 = scmp.ne.s32.totalorder %s64, %s67
      %p76 = scmp.eq.s32.totalorder %s21, 1
      %p77 = por %p75, %p76
      %p78 = scmp.ne.s32.totalorder %s67, %s68
      %p79 = scmp.eq.s32.totalorder %s21, 0
      %p80 = por %p78, %p79
      %p81 = scmp.ne.s32.totalorder %s67, %s68
      %p82 = scmp.eq.s32.totalorder %s22, 1
      %p83 = por %p81, %p82
      %p85 = scmp.ne.s32.totalorder %s68, %s84
      %p86 = scmp.eq.s32.totalorder %s22, 0
      %p87 = por %p85, %p86
      %s88 = ssub.s32 %s24, %s31
      %p89 = scmp.eq.s32.totalorder %s88, 0
      %s91 = sadd.s32 %s90, 1
      %s92 = scalar_select %p89, %s90, %s91
      %p95 = pneg %p89
      %p96 = scmp.eq.s32.totalorder %s16, 1
      %p97 = por %p95, %p96
      %p98 = scmp.ne.s32.totalorder %s90, %s93
      %p99 = scmp.eq.s32.totalorder %s16, 0
      %p100 = por %p98, %p99
      %p101 = scmp.ne.s32.totalorder %s90, %s93
      %p102 = scmp.eq.s32.totalorder %s21, 1
      %p103 = por %p101, %p102
      %p104 = scmp.ne.s32.totalorder %s93, %s94
      %p105 = scmp.eq.s32.totalorder %s21, 0
      %p106 = por %p104, %p105
      %p107 = scmp.ne.s32.totalorder %s93, %s94
      %p108 = scmp.eq.s32.totalorder %s22, 1
      %p109 = por %p107, %p108
      %p111 = scmp.ne.s32.totalorder %s94, %s110
      %p112 = scmp.eq.s32.totalorder %s22, 0
      %p113 = por %p111, %p112
      %s114 = ssub.s32 %s23, %s35
      %s115 = ssub.s32 %s24, %s31
      %s116 = sor.u32 %s114, %s115
      %p117 = scmp.eq.s32.totalorder %s116, 0
      %s119 = sadd.s32 %s118, 1
      %s120 = scalar_select %p117, %s118, %s119
      %p123 = pneg %p117
      %p124 = scmp.eq.s32.totalorder %s16, 1
      %p125 = por %p123, %p124
      %p126 = scmp.ne.s32.totalorder %s118, %s121
      %p127 = scmp.eq.s32.totalorder %s16, 0
      %p128 = por %p126, %p127
      %p129 = scmp.ne.s32.totalorder %s118, %s121
      %p130 = scmp.eq.s32.totalorder %s21, 1
      %p131 = por %p129, %p130
      %p132 = scmp.ne.s32.totalorder %s121, %s122
      %p133 = scmp.eq.s32.totalorder %s21, 0
      %p134 = por %p132, %p133
      %p135 = scmp.ne.s32.totalorder %s121, %s122
      %p136 = scmp.eq.s32.totalorder %s22, 1
      %p137 = por %p135, %p136
      %p139 = scmp.ne.s32.totalorder %s122, %s138
      %p140 = scmp.eq.s32.totalorder %s22, 0
      %p141 = por %p139, %p140
      %p142 = scmp.le.s32.totalorder 1, %s16
      %p143 = scmp.lt.s32.totalorder %s16, 3
      %p144 = pnand %p142, %p143
      %p145 = pneg %p144
      // Predicated region
      $region9: #{tpu_custom_call.1} parent=5 // pred_check
        _
      $region10: #{tpu_custom_call.1} parent=5 // pred_check_branch
        %147 = sbr.rel (%p144) target = $region12
      $region11: #{tpu_custom_call.1} parent=5 // pred_region
        %s148 = ssub.s32 %s16, 1
        // Predicated region
        $region13: #{tpu_custom_call.1} parent=11 // pred_check
          %p149 = pneg %p54
        $region14: #{tpu_custom_call.1} parent=11 // pred_check_branch
          %151 = sbr.rel (%p149) target = $region16
        $region15: #{tpu_custom_call.1} parent=11 // pred_region
          %s152 = smul.u32 2, %s25
          %s154 = ssub.s32 256, 256
          %155 = vsyncadd [#allocation3], %s154
          %s156 = smul.addr %s152, 2
          %s157 = smul.addr %s156, 64
          %s158 = scalar_lea.hbm %s0, %s157
          %s159 = sshll.u32 [#allocation2], 4
          %s160 = int_to_ptr.vmem [resolvable:$true] %s159
          %165 = dma.hbm_to_vmem [thread:$0]  %s158, 256, %s160, [#allocation3], 128, 128, 8
        $region16: #{tpu_custom_call.1} parent=11 // pred_fallthru
          _
      $region12: #{tpu_custom_call.1} parent=5 // pred_fallthru
        _
      %p166 = scmp.lt.s32.totalorder %s16, 2
      // Predicated region
      $region17: #{tpu_custom_call.1} parent=5 // pred_check
        %p167 = pneg %p166
      $region18: #{tpu_custom_call.1} parent=5 // pred_check_branch
        %169 = sbr.rel (%p167) target = $region20
      $region19: #{tpu_custom_call.1} parent=5 // pred_region
        // Predicated region
        $region21: #{tpu_custom_call.1} parent=19 // pred_check
          %p170 = pneg %p74
        $region22: #{tpu_custom_call.1} parent=19 // pred_check_branch
          %172 = sbr.rel (%p170) target = $region24
        $region23: #{tpu_custom_call.1} parent=19 // pred_region
          %s173 = sand.u32 %s16, 1
          %s174 = scalar_lea.sflag [#allocation6], %s173
          %s175 = sand.u32 %s64, 1
          %s176 = smul.addr %s175, 256
          %s177 = scalar_lea.vmem [#allocation5], %s176
          %s178 = smul.u32 2, %s24
          %s180 = ssub.s32 4096, 4096
          %181 = vsyncadd %s174, %s180
          %s182 = smul.addr %s178, 64
          %s183 = scalar_lea.hbm %s1, %s182
          %s184 = sshll.u32 %s177, 4
          %s185 = int_to_ptr.vmem [resolvable:$true] %s184
          %190 = dma.hbm_to_vmem [thread:$0]  %s183, 4096, %s185, %s174, 256, 128, 8
        $region24: #{tpu_custom_call.1} parent=19 // pred_fallthru
          _
        // Predicated region
        $region25: #{tpu_custom_call.1} parent=19 // pred_check
          %p191 = pneg %p100
        $region26: #{tpu_custom_call.1} parent=19 // pred_check_branch
          %193 = sbr.rel (%p191) target = $region28
        $region27: #{tpu_custom_call.1} parent=19 // pred_region
          %s194 = sand.u32 %s16, 1
          %s195 = scalar_lea.sflag [#allocation6], %s194
          %s196 = sand.u32 %s90, 1
          %s197 = smul.addr %s196, 2
          %s198 = scalar_lea.vmem [#allocation7], %s197
          %s199 = smul.u32 2, %s24
          %s201 = ssub.s32 32, 32
          %202 = vsyncadd %s195, %s201
          %s203 = smul.addr %s199, 16
          %s204 = scalar_lea.hbm %s2, %s203
          %s206 = sshll.u32 %s198, 4
          %s207 = int_to_ptr.vmem [resolvable:$true] %s206
          %209 = dma.hbm_to_vmem [thread:$0]  %s204, 32, %s207, %s195
        $region28: #{tpu_custom_call.1} parent=19 // pred_fallthru
          _
      $region20: #{tpu_custom_call.1} parent=5 // pred_fallthru
        _
      %p210 = scmp.le.s32.totalorder 1, %s16
      %p211 = scmp.lt.s32.totalorder %s16, 3
      %p212 = pnand %p210, %p211
      %p213 = pneg %p212
      // Predicated region
      $region29: #{tpu_custom_call.1} parent=5 // pred_check
        _
      $region30: #{tpu_custom_call.1} parent=5 // pred_check_branch
        %215 = sbr.rel (%p212) target = $region32
      $region31: #{tpu_custom_call.1} parent=5 // pred_region
        %s216 = ssub.s32 %s16, 1
        // Predicated region
        $region33: #{tpu_custom_call.1} parent=31 // pred_check
          %p217 = pneg %p54
        $region34: #{tpu_custom_call.1} parent=31 // pred_check_branch
          %219 = sbr.rel (%p217) target = $region36
        $region35: #{tpu_custom_call.1} parent=31 // pred_region
          %220 = dma.done [#allocation3], 256
        $region36: #{tpu_custom_call.1} parent=31 // pred_fallthru
          _
        %s221 = sand.u32 %s21, 1
        %s222 = scalar_lea.sflag [#allocation6], %s221
        %s223 = sand.u32 %s67, 1
        %s224 = smul.addr %s223, 256
        %s225 = scalar_lea.vmem [#allocation5], %s224
        // Predicated region
        $region37: #{tpu_custom_call.1} parent=31 // pred_check
          %p226 = pneg %p80
        $region38: #{tpu_custom_call.1} parent=31 // pred_check_branch
          %228 = sbr.rel (%p226) target = $region40
        $region39: #{tpu_custom_call.1} parent=31 // pred_region
          %229 = dma.done %s222, 4096
        $region40: #{tpu_custom_call.1} parent=31 // pred_fallthru
          _
        %s230 = sand.u32 %s21, 1
        %s231 = scalar_lea.sflag [#allocation6], %s230
        %s232 = sand.u32 %s93, 1
        %s233 = smul.addr %s232, 2
        %s234 = scalar_lea.vmem [#allocation7], %s233
        // Predicated region
        $region41: #{tpu_custom_call.1} parent=31 // pred_check
          %p235 = pneg %p106
        $region42: #{tpu_custom_call.1} parent=31 // pred_check_branch
          %237 = sbr.rel (%p235) target = $region44
        $region43: #{tpu_custom_call.1} parent=31 // pred_region
          %238 = dma.done %s231, 32
        $region44: #{tpu_custom_call.1} parent=31 // pred_fallthru
          _
        %p239 = pneg %p54
        %p240 = pneg %p51
        %s241 = sand.u32 %s21, 1
        %s242 = scalar_lea.sflag [#allocation6], %s241
        %s243 = sand.u32 %s67, 1
        %s244 = smul.addr %s243, 256
        %s245 = scalar_lea.vmem [#allocation5], %s244
        %p246 = pneg %p80
        %p247 = pneg %p77
        %s248 = sand.u32 %s21, 1
        %s249 = scalar_lea.sflag [#allocation6], %s248
        %s250 = sand.u32 %s93, 1
        %s251 = smul.addr %s250, 2
        %s252 = scalar_lea.vmem [#allocation7], %s251
        %p253 = pneg %p106
        %p254 = pneg %p103
        %p255 = pneg %p134
        %p256 = pneg %p131
        %s257 = sand.u32 %s121, 1
        %s258 = scalar_lea.sflag [#allocation4], %s257
        %s259 = sand.u32 %s121, 1
        %s260 = smul.addr %s259, 32
        %s261 = scalar_lea.vmem [#allocation8], %s260
        %s262 = smul.u32 2, %s25
        %s263 = smul.u32 2, %s26
        %s264 = smul.u32 2, %s26
        %s265 = smul.u32 2, %s25
        %s266 = smul.u32 2, %s26
        %v267 = vld [vmem:[#allocation2] sm:$0xff]
        %v268 = vld [vmem:[#allocation2 + $0x8] sm:$0xff]
        %v269 = vld [vmem:[%s225] sm:$0xff]
        %v270 = vld [vmem:[%s225 + $0x8] sm:$0xff]
        %v271 = vld [vmem:[%s225 + $0x10] sm:$0xff]
        %v272 = vld [vmem:[%s225 + $0x18] sm:$0xff]
        %v273 = vld [vmem:[%s225 + $0x20] sm:$0xff]
        %v274 = vld [vmem:[%s225 + $0x28] sm:$0xff]
        %v275 = vld [vmem:[%s225 + $0x30] sm:$0xff]
        %v276 = vld [vmem:[%s225 + $0x38] sm:$0xff]
        %v277 = vld [vmem:[%s225 + $0x40] sm:$0xff]
        %v278 = vld [vmem:[%s225 + $0x48] sm:$0xff]
        %v279 = vld [vmem:[%s225 + $0x50] sm:$0xff]
        %v280 = vld [vmem:[%s225 + $0x58] sm:$0xff]
        %v281 = vld [vmem:[%s225 + $0x60] sm:$0xff]
        %v282 = vld [vmem:[%s225 + $0x68] sm:$0xff]
        %v283 = vld [vmem:[%s225 + $0x70] sm:$0xff]
        %v284 = vld [vmem:[%s225 + $0x78] sm:$0xff]
        %v285 = vld [vmem:[%s225 + $0x80] sm:$0xff]
        %v286 = vld [vmem:[%s225 + $0x88] sm:$0xff]
        %v287 = vld [vmem:[%s225 + $0x90] sm:$0xff]
        %v288 = vld [vmem:[%s225 + $0x98] sm:$0xff]
        %v289 = vld [vmem:[%s225 + $0xa0] sm:$0xff]
        %v290 = vld [vmem:[%s225 + $0xa8] sm:$0xff]
        %v291 = vld [vmem:[%s225 + $0xb0] sm:$0xff]
        %v292 = vld [vmem:[%s225 + $0xb8] sm:$0xff]
        %v293 = vld [vmem:[%s225 + $0xc0] sm:$0xff]
        %v294 = vld [vmem:[%s225 + $0xc8] sm:$0xff]
        %v295 = vld [vmem:[%s225 + $0xd0] sm:$0xff]
        %v296 = vld [vmem:[%s225 + $0xd8] sm:$0xff]
        %v297 = vld [vmem:[%s225 + $0xe0] sm:$0xff]
        %v298 = vld [vmem:[%s225 + $0xe8] sm:$0xff]
        %v299 = vld [vmem:[%s225 + $0xf0] sm:$0xff]
        %v300 = vld [vmem:[%s225 + $0xf8] sm:$0xff]
        %v303 = vunpack.c.l.b16 %v267
        %v304 = vunpack.c.h.b16 %v267
        %v305 = vunpack.c.l.b16 %v268
        %v306 = vunpack.c.h.b16 %v268
        %v307 = vpack.c.b16 %v305, %v303
        %v308 = vpack.c.b16 %v306, %v304
        %v343 = vunpack.c.l.b16 %v269
        %v344 = vunpack.c.h.b16 %v269
        %v345 = vunpack.c.l.b16 %v270
        %v346 = vunpack.c.h.b16 %v270
        %v347 = vunpack.c.l.b16 %v271
        %v348 = vunpack.c.h.b16 %v271
        %v349 = vunpack.c.l.b16 %v272
        %v350 = vunpack.c.h.b16 %v272
        %v351 = vunpack.c.l.b16 %v273
        %v352 = vunpack.c.h.b16 %v273
        %v353 = vunpack.c.l.b16 %v274
        %v354 = vunpack.c.h.b16 %v274
        %v355 = vunpack.c.l.b16 %v275
        %v356 = vunpack.c.h.b16 %v275
        %v357 = vunpack.c.l.b16 %v276
        %v358 = vunpack.c.h.b16 %v276
        %v359 = vunpack.c.l.b16 %v277
        %v360 = vunpack.c.h.b16 %v277
        %v361 = vunpack.c.l.b16 %v278
        %v362 = vunpack.c.h.b16 %v278
        %v363 = vunpack.c.l.b16 %v279
        %v364 = vunpack.c.h.b16 %v279
        %v365 = vunpack.c.l.b16 %v280
        %v366 = vunpack.c.h.b16 %v280
        %v367 = vunpack.c.l.b16 %v281
        %v368 = vunpack.c.h.b16 %v281
        %v369 = vunpack.c.l.b16 %v282
        %v370 = vunpack.c.h.b16 %v282
        %v371 = vunpack.c.l.b16 %v283
        %v372 = vunpack.c.h.b16 %v283
        %v373 = vunpack.c.l.b16 %v284
        %v374 = vunpack.c.h.b16 %v284
        %v375 = vunpack.c.l.b16 %v285
        %v376 = vunpack.c.h.b16 %v285
        %v377 = vunpack.c.l.b16 %v286
        %v378 = vunpack.c.h.b16 %v286
        %v379 = vunpack.c.l.b16 %v287
        %v380 = vunpack.c.h.b16 %v287
        %v381 = vunpack.c.l.b16 %v288
        %v382 = vunpack.c.h.b16 %v288
        %v383 = vunpack.c.l.b16 %v289
        %v384 = vunpack.c.h.b16 %v289
        %v385 = vunpack.c.l.b16 %v290
        %v386 = vunpack.c.h.b16 %v290
        %v387 = vunpack.c.l.b16 %v291
        %v388 = vunpack.c.h.b16 %v291
        %v389 = vunpack.c.l.b16 %v292
        %v390 = vunpack.c.h.b16 %v292
        %v391 = vunpack.c.l.b16 %v293
        %v392 = vunpack.c.h.b16 %v293
        %v393 = vunpack.c.l.b16 %v294
        %v394 = vunpack.c.h.b16 %v294
        %v395 = vunpack.c.l.b16 %v295
        %v396 = vunpack.c.h.b16 %v295
        %v397 = vunpack.c.l.b16 %v296
        %v398 = vunpack.c.h.b16 %v296
        %v399 = vunpack.c.l.b16 %v297
        %v400 = vunpack.c.h.b16 %v297
        %v401 = vunpack.c.l.b16 %v298
        %v402 = vunpack.c.h.b16 %v298
        %v403 = vunpack.c.l.b16 %v299
        %v404 = vunpack.c.h.b16 %v299
        %v405 = vunpack.c.l.b16 %v300
        %v406 = vunpack.c.h.b16 %v300
        %v407 = vpack.c.b16 %v345, %v343
        %v408 = vpack.c.b16 %v346, %v344
        %v409 = vpack.c.b16 %v349, %v347
        %v410 = vpack.c.b16 %v350, %v348
        %v411 = vpack.c.b16 %v353, %v351
        %v412 = vpack.c.b16 %v354, %v352
        %v413 = vpack.c.b16 %v357, %v355
        %v414 = vpack.c.b16 %v358, %v356
        %v415 = vpack.c.b16 %v361, %v359
        %v416 = vpack.c.b16 %v362, %v360
        %v417 = vpack.c.b16 %v365, %v363
        %v418 = vpack.c.b16 %v366, %v364
        %v419 = vpack.c.b16 %v369, %v367
        %v420 = vpack.c.b16 %v370, %v368
        %v421 = vpack.c.b16 %v373, %v371
        %v422 = vpack.c.b16 %v374, %v372
        %v423 = vpack.c.b16 %v377, %v375
        %v424 = vpack.c.b16 %v378, %v376
        %v425 = vpack.c.b16 %v381, %v379
        %v426 = vpack.c.b16 %v382, %v380
        %v427 = vpack.c.b16 %v385, %v383
        %v428 = vpack.c.b16 %v386, %v384
        %v429 = vpack.c.b16 %v389, %v387
        %v430 = vpack.c.b16 %v390, %v388
        %v431 = vpack.c.b16 %v393, %v391
        %v432 = vpack.c.b16 %v394, %v392
        %v433 = vpack.c.b16 %v397, %v395
        %v434 = vpack.c.b16 %v398, %v396
        %v435 = vpack.c.b16 %v401, %v399
        %v436 = vpack.c.b16 %v402, %v400
        %v437 = vpack.c.b16 %v405, %v403
        %v438 = vpack.c.b16 %v406, %v404
        %471 = vmatprep.subr.bf16.mxu0 %v422
        %472 = vmatpush1.bf16.msra.mxu0 %v421
        %473 = vmatprep.subr.bf16.mxu0 %v420
        %474 = vmatpush1.bf16.msra.mxu0 %v419
        %475 = vmatprep.subr.bf16.mxu0 %v418
        %476 = vmatpush1.bf16.msra.mxu0 %v417
        %477 = vmatprep.subr.bf16.mxu0 %v416
        %478 = vmatpush1.bf16.msra.mxu0 %v415
        %479 = vmatprep.subr.bf16.mxu0 %v414
        %480 = vmatpush1.bf16.msra.mxu0 %v413
        %481 = vmatprep.subr.bf16.mxu0 %v412
        %482 = vmatpush1.bf16.msra.mxu0 %v411
        %483 = vmatprep.subr.bf16.mxu0 %v410
        %484 = vmatpush1.bf16.msra.mxu0 %v409
        %485 = vmatprep.subr.bf16.mxu0 %v408
        %486 = vmatpush1.bf16.msra.mxu0 %v407
        %487 = vmatprep.subr.bf16.mxu0 %v438
        %488 = vmatpush2.bf16.msra.mxu0 %v437
        %489 = vmatprep.subr.bf16.mxu0 %v436
        %490 = vmatpush2.bf16.msra.mxu0 %v435
        %491 = vmatprep.subr.bf16.mxu0 %v434
        %492 = vmatpush2.bf16.msra.mxu0 %v433
        %493 = vmatprep.subr.bf16.mxu0 %v432
        %494 = vmatpush2.bf16.msra.mxu0 %v431
        %495 = vmatprep.subr.bf16.mxu0 %v430
        %496 = vmatpush2.bf16.msra.mxu0 %v429
        %497 = vmatprep.subr.bf16.mxu0 %v428
        %498 = vmatpush2.bf16.msra.mxu0 %v427
        %499 = vmatprep.subr.bf16.mxu0 %v426
        %500 = vmatpush2.bf16.msra.mxu0 %v425
        %501 = vmatprep.subr.bf16.mxu0 %v424
        %502 = vmatpush2.bf16.msra.mxu0 %v423
        %503 = vmatprep.mubr.bf16.mxu0 %v308
        %504 = vmatmul.mubr.bf16.gmra.mxu0 %v307
        %v505 = vpop.f32.mrf.mxu0
        %v506 = vadd.f32 0.0, %v505
        %v507 = vpop.f32.mrf.mxu0
        %v508 = vadd.f32 0.0, %v507
        %v509 = vpop.f32.mrf.mxu0
        %v510 = vadd.f32 0.0, %v509
        %v511 = vpop.f32.mrf.mxu0
        %v512 = vadd.f32 0.0, %v511
        %513 = vdwg.mxu0
        %v514 = vmul.f32 %v506, 0.0625
        %v515 = vmul.f32 %v508, 0.0625
        %v516 = vmul.f32 %v510, 0.0625
        %v517 = vmul.f32 %v512, 0.0625
        %v518 = vld [vmem:[%s234] sm:$0x3]
        %v520 = vlaneseq
        %v521 = vshrl.u32 %v520, 7
        %v522 = vsub.s32 0, %v521
        %v523 = vrot.slane %v518, %v522
        %v524 = vlaneseq
        %v525 = vshrl.u32 %v524, 7
        %v526 = vsub.s32 1, %v525
        %v527 = vrot.slane %v518, %v526
        %v530 = vadd.f32 %v514, %v523
        %v531 = vadd.f32 %v515, %v527
        %v532 = vadd.f32 %v516, %v523
        %v533 = vadd.f32 %v517, %v527
        %vm534 = vcmp.ge.f32.partialorder %v530, 0.0
        %vm535 = vcmp.ge.f32.partialorder %v531, 0.0
        %vm536 = vcmp.ge.f32.partialorder %v532, 0.0
        %vm537 = vcmp.ge.f32.partialorder %v533, 0.0
        %v538 = vmul.f32 %v530, 0.2
        %v539 = vmul.f32 %v531, 0.2
        %v540 = vmul.f32 %v532, 0.2
        %v541 = vmul.f32 %v533, 0.2
        %v542 = vsel %vm534, %v530, %v538
        %v543 = vsel %vm535, %v531, %v539
        %v544 = vsel %vm536, %v532, %v540
        %v545 = vsel %vm537, %v533, %v541
        %v546 = vmul.f32 %v542, 1.4142135
        %v547 = vmul.f32 %v543, 1.4142135
        %v548 = vmul.f32 %v544, 1.4142135
        %v549 = vmul.f32 %v545, 1.4142135
        %550 = vst [vmem:[%s261] sm:$0xff] %v546
        %551 = vst [vmem:[%s261 + $0x8] sm:$0xff] %v547
        %552 = vst [vmem:[%s261 + $0x10] sm:$0xff] %v548
        %553 = vst [vmem:[%s261 + $0x18] sm:$0xff] %v549
        %s554 = sand.u32 %s121, 1
        %s555 = scalar_lea.sflag [#allocation4], %s554
        %s556 = sand.u32 %s121, 1
        %s557 = smul.addr %s556, 32
        %s558 = scalar_lea.vmem [#allocation8], %s557
        // Predicated region
        $region45: #{tpu_custom_call.1} parent=31 // pred_check
          %p559 = pneg %p131
        $region46: #{tpu_custom_call.1} parent=31 // pred_check_branch
          %561 = sbr.rel (%p559) target = $region48
        $region47: #{tpu_custom_call.1} parent=31 // pred_region
          %s562 = smul.u32 2, %s25
          %s563 = smul.u32 2, %s26
          %s565 = ssub.s32 512, 512
          %566 = vsyncadd %s555, %s565
          %s567 = smul.addr %s562, 4
          %s568 = sadd.s32 %s563, %s567
          %s569 = smul.addr %s568, 128
          %s570 = scalar_lea.hbm %s3, %s569
          %s571 = sshll.u32 %s558, 4
          %s572 = int_to_ptr.vmem [resolvable:$true] %s571
          %577 = dma.vmem_to_hbm [thread:$0]  %s572, 512, %s570, %s555, 256, 512, 16
        $region48: #{tpu_custom_call.1} parent=31 // pred_fallthru
          _
      $region32: #{tpu_custom_call.1} parent=5 // pred_fallthru
        _
      %p578 = scmp.le.s32.totalorder 2, %s16
      // Predicated region
      $region49: #{tpu_custom_call.1} parent=5 // pred_check
        %p579 = pneg %p578
      $region50: #{tpu_custom_call.1} parent=5 // pred_check_branch
        %581 = sbr.rel (%p579) target = $region52
      $region51: #{tpu_custom_call.1} parent=5 // pred_region
        %s582 = ssub.s32 %s16, 2
        // Predicated region
        $region53: #{tpu_custom_call.1} parent=51 // pred_check
          %p583 = pneg %p137
        $region54: #{tpu_custom_call.1} parent=51 // pred_check_branch
          %585 = sbr.rel (%p583) target = $region56
        $region55: #{tpu_custom_call.1} parent=51 // pred_region
          %s586 = sand.u32 %s122, 1
          %s587 = scalar_lea.sflag [#allocation4], %s586
          %s588 = sand.u32 %s122, 1
          %s589 = smul.addr %s588, 32
          %s590 = scalar_lea.vmem [#allocation8], %s589
          %591 = dma.done %s587, 512
        $region56: #{tpu_custom_call.1} parent=51 // pred_fallthru
          _
      $region52: #{tpu_custom_call.1} parent=5 // pred_fallthru
        _
    $region6: #{tpu_custom_call.1} parent=1 // loop_footer
      %s20 = sadd.s32 1, %s16
    $region7: #{tpu_custom_call.1} parent=1 // loop_footer_branch
      %15 = sbr.rel target = $region3
    $region8: #{tpu_custom_call.1} parent=1 // loop_exit
      _
    %592 = vsyncpa [#allocation3], 1
    %s593 = scalar_lea.sflag [#allocation3], 1
    %594 = vsyncpa %s593, 1
    %595 = vsyncpa [#allocation6], 1
    %s596 = scalar_lea.sflag [#allocation6], 1
    %597 = vsyncpa %s596, 1
    %598 = vsyncpa [#allocation4], 1
    %s599 = scalar_lea.sflag [#allocation4], 1
    %600 = vsyncpa %s599, 1

</llo_original>
